<compile_context>
chip_gen: v5e
topology: v5e:2x2
jax: 0.10.0
libtpu: 0.0.40
codegen_flags: <defaults>
</compile_context>

<pallas_src>
import jax
import jax.numpy as jnp
import numpy as np
from jax import lax
from jax.experimental import pallas as pl
from jax.experimental.pallas import tpu as pltpu


def _make_vlsa_kernel(N, TN):
    ragged = (N % TN) != 0

    def vlsa_kernel(scale_ref, x_ref, w_ref, b_ref, t_ref,
                    logits_ref, img_ref, txt_ref,
                    sum_ref, tn_ref):
        i = pl.program_id(0)
        n_steps = pl.num_programs(0)

        # ---- one-time work: normalize text features (cache in VMEM scratch),
        #      zero the pooled-feature accumulator ----
        @pl.when(i == 0)
        def _():
            t = t_ref[...]
            t_ss = jnp.sum(t * t, axis=-1, keepdims=True)
            # F.normalize eps=1e-12  <=>  rsqrt(max(ss, 1e-24))
            t_n = t * lax.rsqrt(jnp.maximum(t_ss, 1e-24))
            tn_ref[...] = t_n
            txt_ref[...] = t_n
            sum_ref[...] = jnp.zeros_like(sum_ref)

        # ---- encode_instances: [TN,F] @ [F,D] + b  (bf16 MXU operands,
        #      f32 accumulation) ----
        img = jnp.dot(x_ref[...], w_ref[...],
                      preferred_element_type=jnp.float32)
        img = img + b_ref[...]

        # ---- F.normalize(image_features, dim=-1), eps=1e-12, via rsqrt ----
        ss = jnp.sum(img * img, axis=-1, keepdims=True)
        img_n = img * lax.rsqrt(jnp.maximum(ss, 1e-24))
        img_ref[...] = img_n

        # ---- accumulate pooled image features (mask ragged last tile) ----
        if ragged:
            row = i * TN + lax.broadcasted_iota(jnp.int32, (TN, 1), 0)
            img_n = jnp.where(row < N, img_n, 0.0)
        sum_ref[...] += jnp.sum(img_n, axis=0, keepdims=True)

        # ---- finalize: mean-pool BEFORE the text matmul (mean and matmul
        #      commute), single [1,D]x[C,D] contraction, no transpose ----
        @pl.when(i == n_steps - 1)
        def _():
            img_mean = sum_ref[...] * (1.0 / N)
            logits = lax.dot_general(
                img_mean, tn_ref[...],
                dimension_numbers=(((1,), (1,)), ((), ())),
                preferred_element_type=jnp.float32)
            logits_ref[...] = jnp.exp(scale_ref[0]) * logits

    return vlsa_kernel


def vlsa_forward(X, w_enc, b_enc, text_feats, logit_scale):
    """X: [1, N, F] bag of instance feature vectors."""
    x2d = X[0]                        # [N, F]
    N, F = x2d.shape
    D = w_enc.shape[1]
    C = text_feats.shape[0]

    # Instance tile: whole bag if small, else 256 rows (multiple of 8 sublanes).
    # Working set per step ~ 2*(TN*F*2 + TN*D*4) + F*D*2 + 2*C*D*4 bytes, well
    # inside the 32 MiB limit below (safe on v7x's 64 MiB VMEM).
    TN = N if N <= 256 else 256
    grid = (pl.cdiv(N, TN),)

    # bf16 operands for the MXU (halves X / W_enc DMA bytes); accumulation and
    # all elementwise math stay f32 inside the kernel.
    x_bf = x2d.astype(jnp.bfloat16)
    w_bf = w_enc.astype(jnp.bfloat16)

    # NOTE: real CLIP dims (F=768, D=512) are already lane-dense; if deploying
    # with small D / C, pad them to multiples of 128 for unmasked stores.
    out_shapes = (
        jax.ShapeDtypeStruct((1, C), jnp.float32),   # pooled bag logits
        jax.ShapeDtypeStruct((N, D), jnp.float32),   # normalized image feats
        jax.ShapeDtypeStruct((C, D), jnp.float32),   # normalized text feats
    )

    grid_spec = pltpu.PrefetchScalarGridSpec(
        num_scalar_prefetch=0,
        grid=grid,
        in_specs=[
            # logit_scale lives in SMEM (scalar parameter)
            pl.BlockSpec(memory_space=pltpu.MemorySpace.SMEM),
            pl.BlockSpec((TN, F), lambda i: (i, 0)),   # X tile (pipelined)
            pl.BlockSpec((F, D), lambda i: (0, 0)),    # W_enc (resident)
            pl.BlockSpec((1, D), lambda i: (0, 0)),    # b_enc (resident)
            pl.BlockSpec((C, D), lambda i: (0, 0)),    # text feats (resident)
        ],
        out_specs=[
            pl.BlockSpec((1, C), lambda i: (0, 0)),    # pooled logits (final step)
            pl.BlockSpec((TN, D), lambda i: (i, 0)),   # per-instance img feats
            pl.BlockSpec((C, D), lambda i: (0, 0)),    # normalized text feats
        ],
        scratch_shapes=[
            pltpu.VMEM((1, D), jnp.float32),           # pooled feature sum
            pltpu.VMEM((C, D), jnp.float32),           # cached normalized text
        ],
    )

    return pl.pallas_call(
        _make_vlsa_kernel(N, TN),
        grid_spec=grid_spec,
        out_shape=out_shapes,
        compiler_params=pltpu.CompilerParams(
            # the single grid axis is the instance reduction -> "arbitrary"
            dimension_semantics=("arbitrary",),
            vmem_limit_bytes=32 * 1024 * 1024,
        ),
    )(logit_scale, x_bf, w_bf, b_enc, text_feats)


def vlsa_reference(X, w_enc, b_enc, text_feats, logit_scale):
    """Pure-JAX f32 reference mirroring the PyTorch forward()."""
    img = X[0] @ w_enc + b_enc
    img = img / jnp.maximum(
        jnp.linalg.norm(img, axis=-1, keepdims=True), 1e-12)
    txt = text_feats / jnp.maximum(
        jnp.linalg.norm(text_feats, axis=-1, keepdims=True), 1e-12)
    logits = jnp.exp(logit_scale[0]) * img @ txt.T
    logits = jnp.mean(logits, axis=0, keepdims=True)
    return logits, img, txt


if __name__ == "__main__":
    key = jax.random.PRNGKey(0)
    N, F, D, C = 8, 32, 32, 4          # instances, feat_dim, embed_dim, classes
    k1, k2, k3 = jax.random.split(key, 3)

    X = jax.random.normal(k1, (1, N, F), jnp.float32)
    w_enc = jax.random.normal(k2, (F, D), jnp.float32) * 0.05
    b_enc = jnp.zeros((1, D), jnp.float32)
    text_feats = jax.random.normal(k3, (C, D), jnp.float32)
    logit_scale = jnp.array([np.log(1.0 / 0.07)], jnp.float32)  # CLIP init

    logits, img_f, txt_f = vlsa_forward(X, w_enc, b_enc, text_feats, logit_scale)
    jax.block_until_ready((logits, img_f, txt_f))

    ref_logits, ref_img, ref_txt = vlsa_reference(
        X, w_enc, b_enc, text_feats, logit_scale)

    # Tolerances loosened vs. the f32 reference because the encoder matmul now
    # runs with bf16 MXU operands (f32 accumulation); observed error ~1e-2 rel.
    np.testing.assert_allclose(np.asarray(logits), np.asarray(ref_logits),
                               rtol=2e-2, atol=2e-2)
    np.testing.assert_allclose(np.asarray(img_f), np.asarray(ref_img),
                               rtol=2e-2, atol=2e-2)
    np.testing.assert_allclose(np.asarray(txt_f), np.asarray(ref_txt),
                               rtol=1e-5, atol=1e-5)

    print("KERNEL_OK")
</pallas_src>

<mosaic_0001>
module attributes {stable_mosaic.version = 11 : i64} {
  func.func @vlsa_kernel(%arg0: i32, %arg1: memref<1xf32, #tpu.memory_space<smem>>, %arg2: memref<8x32xbf16, #tpu.memory_space<vmem>>, %arg3: memref<32x32xbf16, #tpu.memory_space<vmem>>, %arg4: memref<1x32xf32, #tpu.memory_space<vmem>>, %arg5: memref<4x32xf32, #tpu.memory_space<vmem>>, %arg6: memref<1x4xf32, #tpu.memory_space<vmem>>, %arg7: memref<8x32xf32, #tpu.memory_space<vmem>>, %arg8: memref<4x32xf32, #tpu.memory_space<vmem>>, %arg9: memref<1x32xf32, #tpu.memory_space<vmem>>, %arg10: memref<4x32xf32, #tpu.memory_space<vmem>>) attributes {dimension_semantics = [#tpu.dimension_semantics<arbitrary>], iteration_bounds = array<i64: 1>, scalar_prefetch = 0 : i64, scratch_operands = 2 : i64, tpu.core_type = #tpu.core_type<tc>, window_params = [{transform_indices = @transform_0, window_bounds = array<i64: 1>}, {transform_indices = @transform_1, window_bounds = array<i64: 8, 32>}, {pipeline_mode = #tpu.pipeline_mode<synchronous>, transform_indices = @transform_2, window_bounds = array<i64: 32, 32>}, {pipeline_mode = #tpu.pipeline_mode<synchronous>, transform_indices = @transform_3, window_bounds = array<i64: 1, 32>}, {pipeline_mode = #tpu.pipeline_mode<synchronous>, transform_indices = @transform_4, window_bounds = array<i64: 4, 32>}, {pipeline_mode = #tpu.pipeline_mode<synchronous>, transform_indices = @transform_5, window_bounds = array<i64: 1, 4>}, {transform_indices = @transform_6, window_bounds = array<i64: 8, 32>}, {pipeline_mode = #tpu.pipeline_mode<synchronous>, transform_indices = @transform_7, window_bounds = array<i64: 4, 32>}]} {
    %c0_i32 = arith.constant 0 : i32
    %0 = arith.cmpi eq, %arg0, %c0_i32 : i32
    %1 = arith.extui %0 : i1 to i32
    %c0_i32_0 = arith.constant 0 : i32
    %2 = arith.cmpi ne, %1, %c0_i32_0 : i32
    scf.if %2 {
      %c0_17 = arith.constant 0 : index
      %c0_18 = arith.constant 0 : index
      %26 = vector.load %arg5[%c0_17, %c0_18] : memref<4x32xf32, #tpu.memory_space<vmem>>, vector<4x32xf32>
      %27 = arith.mulf %26, %26 : vector<4x32xf32>
      %cst_19 = arith.constant dense<0.000000e+00> : vector<4xf32>
      %28 = vector.multi_reduction <add>, %27, %cst_19 [1] : vector<4x32xf32> to vector<4xf32>
      %29 = vector.shape_cast %28 : vector<4xf32> to vector<4x1xf32>
      %cst_20 = arith.constant 1.000000e-24 : f32
      %30 = vector.broadcast %cst_20 : f32 to vector<4x1xf32>
      %31 = arith.maximumf %29, %30 : vector<4x1xf32>
      %32 = math.rsqrt %31 : vector<4x1xf32>
      %33 = vector.broadcast %32 : vector<4x1xf32> to vector<4x32xf32>
      %34 = arith.mulf %26, %33 : vector<4x32xf32>
      %c0_21 = arith.constant 0 : index
      %c0_22 = arith.constant 0 : index
      %35 = vector.load %arg10[%c0_21, %c0_22] : memref<4x32xf32, #tpu.memory_space<vmem>>, vector<4x32xf32>
      tpu.vector_store %arg10[%c0_21, %c0_22], %34 {strides = array<i32>} : memref<4x32xf32, #tpu.memory_space<vmem>>, vector<4x32xf32>,
      %c0_23 = arith.constant 0 : index
      %c0_24 = arith.constant 0 : index
      %36 = vector.load %arg8[%c0_23, %c0_24] : memref<4x32xf32, #tpu.memory_space<vmem>>, vector<4x32xf32>
      tpu.vector_store %arg8[%c0_23, %c0_24], %34 {strides = array<i32>} : memref<4x32xf32, #tpu.memory_space<vmem>>, vector<4x32xf32>,
      %cst_25 = arith.constant 0.000000e+00 : f32
      %37 = vector.broadcast %cst_25 : f32 to vector<1x32xf32>
      %c0_26 = arith.constant 0 : index
      %c0_27 = arith.constant 0 : index
      %38 = vector.load %arg9[%c0_26, %c0_27] : memref<1x32xf32, #tpu.memory_space<vmem>>, vector<1x32xf32>
      tpu.vector_store %arg9[%c0_26, %c0_27], %37 {strides = array<i32>} : memref<1x32xf32, #tpu.memory_space<vmem>>, vector<1x32xf32>,
    } else {
    }
    %c0 = arith.constant 0 : index
    %c0_1 = arith.constant 0 : index
    %3 = vector.load %arg2[%c0, %c0_1] : memref<8x32xbf16, #tpu.memory_space<vmem>>, vector<8x32xbf16>
    %c0_2 = arith.constant 0 : index
    %c0_3 = arith.constant 0 : index
    %4 = vector.load %arg3[%c0_2, %c0_3] : memref<32x32xbf16, #tpu.memory_space<vmem>>, vector<32x32xbf16>
    %cst = arith.constant dense<0.000000e+00> : vector<8x32xf32>
    %5 = tpu.matmul %3, %4, %cst {dimension_numbers = #tpu.dot_dimension_numbers<[1], [0], [0], [1], [0, 0, 1, 1], [], []>} : vector<8x32xbf16>, vector<32x32xbf16>, vector<8x32xf32> -> vector<8x32xf32>
    %c0_4 = arith.constant 0 : index
    %c0_5 = arith.constant 0 : index
    %6 = vector.load %arg4[%c0_4, %c0_5] : memref<1x32xf32, #tpu.memory_space<vmem>>, vector<1x32xf32>
    %7 = vector.broadcast %6 : vector<1x32xf32> to vector<8x32xf32>
    %8 = arith.addf %5, %7 : vector<8x32xf32>
    %9 = arith.mulf %8, %8 : vector<8x32xf32>
    %cst_6 = arith.constant dense<0.000000e+00> : vector<8xf32>
    %10 = vector.multi_reduction <add>, %9, %cst_6 [1] : vector<8x32xf32> to vector<8xf32>
    %11 = vector.shape_cast %10 : vector<8xf32> to vector<8x1xf32>
    %cst_7 = arith.constant 1.000000e-24 : f32
    %12 = vector.broadcast %cst_7 : f32 to vector<8x1xf32>
    %13 = arith.maximumf %11, %12 : vector<8x1xf32>
    %14 = math.rsqrt %13 : vector<8x1xf32>
    %15 = vector.broadcast %14 : vector<8x1xf32> to vector<8x32xf32>
    %16 = arith.mulf %8, %15 : vector<8x32xf32>
    %c0_8 = arith.constant 0 : index
    %c0_9 = arith.constant 0 : index
    %17 = vector.load %arg7[%c0_8, %c0_9] : memref<8x32xf32, #tpu.memory_space<vmem>>, vector<8x32xf32>
    tpu.vector_store %arg7[%c0_8, %c0_9], %16 {strides = array<i32>} : memref<8x32xf32, #tpu.memory_space<vmem>>, vector<8x32xf32>,
    %c0_10 = arith.constant 0 : index
    %c0_11 = arith.constant 0 : index
    %18 = vector.load %arg9[%c0_10, %c0_11] : memref<1x32xf32, #tpu.memory_space<vmem>>, vector<1x32xf32>
    %cst_12 = arith.constant dense<0.000000e+00> : vector<32xf32>
    %19 = vector.multi_reduction <add>, %16, %cst_12 [0] : vector<8x32xf32> to vector<32xf32>
    %20 = vector.shape_cast %19 : vector<32xf32> to vector<1x32xf32>
    %21 = arith.addf %18, %20 : vector<1x32xf32>
    %c0_13 = arith.constant 0 : index
    %c0_14 = arith.constant 0 : index
    %22 = vector.load %arg9[%c0_13, %c0_14] : memref<1x32xf32, #tpu.memory_space<vmem>>, vector<1x32xf32>
    tpu.vector_store %arg9[%c0_13, %c0_14], %21 {strides = array<i32>} : memref<1x32xf32, #tpu.memory_space<vmem>>, vector<1x32xf32>,
    %c0_i32_15 = arith.constant 0 : i32
    %23 = arith.cmpi eq, %arg0, %c0_i32_15 : i32
    %24 = arith.extui %23 : i1 to i32
    %c0_i32_16 = arith.constant 0 : i32
    %25 = arith.cmpi ne, %24, %c0_i32_16 : i32
    scf.if %25 {
      %c0_17 = arith.constant 0 : index
      %c0_18 = arith.constant 0 : index
      %26 = vector.load %arg9[%c0_17, %c0_18] : memref<1x32xf32, #tpu.memory_space<vmem>>, vector<1x32xf32>
      %cst_19 = arith.constant 1.250000e-01 : f32
      %27 = vector.broadcast %cst_19 : f32 to vector<1x32xf32>
      %28 = arith.mulf %26, %27 : vector<1x32xf32>
      %c0_20 = arith.constant 0 : index
      %c0_21 = arith.constant 0 : index
      %29 = vector.load %arg10[%c0_20, %c0_21] : memref<4x32xf32, #tpu.memory_space<vmem>>, vector<4x32xf32>
      %cst_22 = arith.constant dense<0.000000e+00> : vector<1x4xf32>
      %30 = tpu.matmul %28, %29, %cst_22 {dimension_numbers = #tpu.dot_dimension_numbers<[1], [1], [0], [0], [0, 0, 1, 0], [], []>} : vector<1x32xf32>, vector<4x32xf32>, vector<1x4xf32> -> vector<1x4xf32>
      %c0_23 = arith.constant 0 : index
      %31 = memref.load %arg1[%c0_23] : memref<1xf32, #tpu.memory_space<smem>>
      %32 = math.exp %31 : f32
      %33 = vector.broadcast %32 : f32 to vector<1x4xf32>
      %34 = arith.mulf %33, %30 : vector<1x4xf32>
      %c0_24 = arith.constant 0 : index
      %c0_25 = arith.constant 0 : index
      %35 = vector.load %arg6[%c0_24, %c0_25] : memref<1x4xf32, #tpu.memory_space<vmem>>, vector<1x4xf32>
      tpu.vector_store %arg6[%c0_24, %c0_25], %34 {strides = array<i32>} : memref<1x4xf32, #tpu.memory_space<vmem>>, vector<1x4xf32>,
    } else {
    }
    return
  }
  func.func @transform_0(%arg0: i32) -> i32 {
    %c0_i32 = arith.constant 0 : i32
    %c0_i32_0 = arith.constant 0 : i32
    return %c0_i32 : i32
  }
  func.func @transform_1(%arg0: i32) -> (i32, i32) {
    %c0_i32 = arith.constant 0 : i32
    %c0_i32_0 = arith.constant 0 : i32
    return %arg0, %c0_i32 : i32, i32
  }
  func.func @transform_2(%arg0: i32) -> (i32, i32) {
    %c0_i32 = arith.constant 0 : i32
    %c0_i32_0 = arith.constant 0 : i32
    %c0_i32_1 = arith.constant 0 : i32
    return %c0_i32, %c0_i32_0 : i32, i32
  }
  func.func @transform_3(%arg0: i32) -> (i32, i32) {
    %c0_i32 = arith.constant 0 : i32
    %c0_i32_0 = arith.constant 0 : i32
    %c0_i32_1 = arith.constant 0 : i32
    return %c0_i32, %c0_i32_0 : i32, i32
  }
  func.func @transform_4(%arg0: i32) -> (i32, i32) {
    %c0_i32 = arith.constant 0 : i32
    %c0_i32_0 = arith.constant 0 : i32
    %c0_i32_1 = arith.constant 0 : i32
    return %c0_i32, %c0_i32_0 : i32, i32
  }
  func.func @transform_5(%arg0: i32) -> (i32, i32) {
    %c0_i32 = arith.constant 0 : i32
    %c0_i32_0 = arith.constant 0 : i32
    %c0_i32_1 = arith.constant 0 : i32
    return %c0_i32, %c0_i32_0 : i32, i32
  }
  func.func @transform_6(%arg0: i32) -> (i32, i32) {
    %c0_i32 = arith.constant 0 : i32
    %c0_i32_0 = arith.constant 0 : i32
    return %arg0, %c0_i32 : i32, i32
  }
  func.func @transform_7(%arg0: i32) -> (i32, i32) {
    %c0_i32 = arith.constant 0 : i32
    %c0_i32_0 = arith.constant 0 : i32
    %c0_i32_1 = arith.constant 0 : i32
    return %c0_i32, %c0_i32_0 : i32, i32
  }
}

</mosaic_0001>

<llo_original>
// kernel: tpu_custom_call.1
$region0: #{tpu_custom_call.1}
  #allocation0 [shape = 'u32[]', space=smem, size = 0x4, offset = 0x4, fixed_abs, tag = 'smem constant byte address 0x4 - core index']
  #allocation1 [shape = 'u32[72,128]{1,0:T(1,128)}', space=vmem, size = 0x9000, scoped, tag = 'internal scratch']
  #allocation2 [shape = 'f32[1,32]{1,0:T(1,128)}', space=vmem, size = 0x200, scoped, tag = 'scratch operand']
  #allocation3 [shape = 'f32[4,32]{1,0:T(4,128)}', space=vmem, size = 0x800, scoped, tag = 'scratch operand']
  #allocation4 [shape = 'f32[1]{0:T(128)S(6)}', space=smem, size = 0x200, scoped, tag = 'scoped memory for tpu_custom_call.1']
  %s0 = inlined_call_operand.<no memory space> [shape: f32[1], index: 0, kind: input, shape index: {}]
  %s1 = inlined_call_operand.hbm [shape: bf16[8,32], index: 1, kind: input, shape index: {}]
  %s2 = inlined_call_operand.hbm [shape: bf16[32,32], index: 2, kind: input, shape index: {}]
  %s3 = inlined_call_operand.hbm [shape: f32[1,32], index: 3, kind: input, shape index: {}]
  %s4 = inlined_call_operand.vmem [shape: f32[4,32], index: 4, kind: input, shape index: {}]
  %s5 = inlined_call_operand.hbm [shape: f32[1,4], index: 5, kind: output, shape index: {0}]
  %s6 = inlined_call_operand.hbm [shape: f32[8,32], index: 6, kind: output, shape index: {1}]
  %s7 = inlined_call_operand.hbm [shape: f32[4,32], index: 7, kind: output, shape index: {2}]
  %8 = xla_tuple %s5, %s6, %s7
  %s9 = sld [smem:[#allocation0]]
  $region66: #{tpu_custom_call.1} parent=0
    _
  %s11 = ssub.s32 1, %s9
  %s12 = scalar_select 0, %s11, %s9
  %13 = sst [smem:[#allocation4]] %s0
  $region1: #{tpu_custom_call.1} parent=0
    #allocation5 [shape = 'u8[2048]{0}', space=vmem, size = 0x800, scoped, tag = 'input window, operand 1, single buffered']
    #allocation6 [shape = 's32[1]{0}', space=sflag, size = 0x4, scoped, tag = 'scoped memory for tpu_custom_call.1']
    #allocation7 [shape = 's32[1]{0}', space=sflag, size = 0x4, scoped, tag = 'scoped memory for tpu_custom_call.1']
    #allocation8 [shape = 'u8[8192]{0}', space=vmem, size = 0x2000, scoped, tag = 'input window, operand 2, single buffered']
    #allocation9 [shape = 's32[1]{0}', space=sflag, size = 0x4, scoped, tag = 'scoped memory for tpu_custom_call.1']
    #allocation10 [shape = 'u8[512]{0}', space=vmem, size = 0x400, scoped, tag = 'input window, operand 3, single buffered']
    #allocation11 [shape = 'u8[512]{0}', space=vmem, size = 0x400, scoped, tag = 'output window, operand 0, single buffered']
    #allocation12 [shape = 'u8[4096]{0}', space=vmem, size = 0x1000, scoped, tag = 'output window, operand 1, single buffered']
    #allocation13 [shape = 's32[1]{0}', space=sflag, size = 0x4, scoped, tag = 'scoped memory for tpu_custom_call.1']
    #allocation14 [shape = 'u8[2048]{0}', space=vmem, size = 0x800, scoped, tag = 'output window, operand 2, single buffered']
    %14 = vsyncpa [#allocation6], 0
    %15 = vsyncpa [#allocation9], 0
    %16 = vsyncpa [#allocation7], 0
    %17 = vsyncpa [#allocation13], 0
    // Predicated region
    $region2: #{tpu_custom_call.1} parent=1 // pred_check
      _
    $region3: #{tpu_custom_call.1} parent=1 // pred_check_branch
      %19 = sbr.rel (0) target = $region5
    $region4: #{tpu_custom_call.1} parent=1 // pred_region
      _
    $region5: #{tpu_custom_call.1} parent=1 // pred_fallthru
      _
    // Predicated region
    $region6: #{tpu_custom_call.1} parent=1 // pred_check
      _
    $region7: #{tpu_custom_call.1} parent=1 // pred_check_branch
      %21 = sbr.rel (0) target = $region9
    $region8: #{tpu_custom_call.1} parent=1 // pred_region
      %23 = vsyncadd [#allocation6], 0
      %s25 = sshll.u32 %s1, 4
      %s26 = int_to_ptr.hbm [resolvable:$true] %s25
      %s27 = sshll.u32 [#allocation5], 4
      %s28 = int_to_ptr.vmem [resolvable:$true] %s27
      %30 = dma.hbm_to_vmem [thread:$0]  %s26, 64, %s28, [#allocation6]
    $region9: #{tpu_custom_call.1} parent=1 // pred_fallthru
      _
    // Predicated region
    $region10: #{tpu_custom_call.1} parent=1 // pred_check
      _
    $region11: #{tpu_custom_call.1} parent=1 // pred_check_branch
      %32 = sbr.rel (0) target = $region13
    $region12: #{tpu_custom_call.1} parent=1 // pred_region
      %34 = vsyncadd [#allocation9], 0
      %s35 = sshll.u32 %s2, 4
      %s36 = int_to_ptr.hbm [resolvable:$true] %s35
      %s37 = sshll.u32 [#allocation8], 4
      %s38 = int_to_ptr.vmem [resolvable:$true] %s37
      %43 = dma.hbm_to_vmem [thread:$0]  %s36, 256, %s38, [#allocation9], 64, 64, 4
    $region13: #{tpu_custom_call.1} parent=1 // pred_fallthru
      _
    // Predicated region
    $region14: #{tpu_custom_call.1} parent=1 // pred_check
      _
    $region15: #{tpu_custom_call.1} parent=1 // pred_check_branch
      %45 = sbr.rel (0) target = $region17
    $region16: #{tpu_custom_call.1} parent=1 // pred_region
      %47 = vsyncadd [#allocation9], 0
      %s49 = sshll.u32 %s3, 4
      %s50 = int_to_ptr.hbm [resolvable:$true] %s49
      %s51 = sshll.u32 [#allocation10], 4
      %s52 = int_to_ptr.vmem [resolvable:$true] %s51
      %54 = dma.hbm_to_vmem [thread:$0]  %s50, 16, %s52, [#allocation9]
    $region17: #{tpu_custom_call.1} parent=1 // pred_fallthru
      _
    // Predicated region
    $region18: #{tpu_custom_call.1} parent=1 // pred_check
      _
    $region19: #{tpu_custom_call.1} parent=1 // pred_check_branch
      %56 = sbr.rel (0) target = $region21
    $region20: #{tpu_custom_call.1} parent=1 // pred_region
      _
    $region21: #{tpu_custom_call.1} parent=1 // pred_fallthru
      _
    // Predicated region
    $region22: #{tpu_custom_call.1} parent=1 // pred_check
      _
    $region23: #{tpu_custom_call.1} parent=1 // pred_check_branch
      %58 = sbr.rel (0) target = $region25
    $region24: #{tpu_custom_call.1} parent=1 // pred_region
      %60 = dma.done [#allocation6], 64
    $region25: #{tpu_custom_call.1} parent=1 // pred_fallthru
      _
    // Predicated region
    $region26: #{tpu_custom_call.1} parent=1 // pred_check
      _
    $region27: #{tpu_custom_call.1} parent=1 // pred_check_branch
      %62 = sbr.rel (0) target = $region29
    $region28: #{tpu_custom_call.1} parent=1 // pred_region
      %64 = dma.done [#allocation9], 256
    $region29: #{tpu_custom_call.1} parent=1 // pred_fallthru
      _
    // Predicated region
    $region30: #{tpu_custom_call.1} parent=1 // pred_check
      _
    $region31: #{tpu_custom_call.1} parent=1 // pred_check_branch
      %66 = sbr.rel (0) target = $region33
    $region32: #{tpu_custom_call.1} parent=1 // pred_region
      %68 = dma.done [#allocation9], 16
    $region33: #{tpu_custom_call.1} parent=1 // pred_fallthru
      _
    %p70 = scmp.eq.s32.totalorder 0, 0
    // Predicated region
    $region34: #{tpu_custom_call.1} parent=1 // pred_check
      %p71 = pneg %p70
    $region35: #{tpu_custom_call.1} parent=1 // pred_check_branch
      %73 = sbr.rel (%p71) target = $region37
    $region36: #{tpu_custom_call.1} parent=1 // pred_region
      %v74 = vld [vmem:[%s4] sm:$0xf]
      %v75 = vmul.f32 %v74, %v74
      %vm76 = vcmask 257024
      %v77 = vsel %vm76, %v75, 0.0
      %78 = vadd.xlane.f32.xlu0 %v77
      %v79 = vpop.xlane.xlu0 %78
      %v80 = vmax.f32 %v79, 1e-24
      %v81 = vrsqrt.pop %v80
      %v82 = vmul.f32 %v81, %v80
      %v83 = vmul.f32 %v82, %v81
      %v84 = vmul.f32 0.5, %v83
      %v85 = vsub.f32 1.5, %v84
      %v86 = vmul.f32 %v81, %v85
      %vm87 = vweird.f32 %v80
      %vm88 = vweird.f32 %v81
      %vm89 = vmor %vm87, %vm88
      %v90 = vsel %vm89, %v81, %v86
      %v91 = vmul.f32 %v74, %v90
      %92 = vst.msk [vmem:[#allocation3] sm:$0xf] %vm76, %v91
      %93 = vst.msk [vmem:[#allocation14] sm:$0xf] %vm76, %v91
      %vm94 = vcmask 253952
      %95 = vst.msk [vmem:[#allocation2] sm:$0x1] %vm94, 0.0
    $region37: #{tpu_custom_call.1} parent=1 // pred_fallthru
      _
    %v96 = vld [vmem:[#allocation5] sm:$0xf]
    %v97 = vld [vmem:[#allocation8] sm:$0xf]
    %v98 = vld [vmem:[#allocation8 + $0x4] sm:$0xf]
    %v99 = vld [vmem:[#allocation8 + $0x8] sm:$0xf]
    %v100 = vld [vmem:[#allocation8 + $0xc] sm:$0xf]
    %v101 = vld [vmem:[#allocation10] sm:$0x1]
    %v103 = vperm.slane %v101, 0
    %v109 = vunpack.c.l.b16 %v97
    %v110 = vunpack.c.l.b16 %v98
    %v111 = vunpack.c.l.b16 %v99
    %v112 = vunpack.c.l.b16 %v100
    %v113 = vpack.c.b16 %v110, %v109
    %v114 = vpack.c.b16 %v112, %v111
    %vm117 = vcmask 261120
    %v119 = vsel %vm117, %v96, 0
    %121 = vmatpush.bf16.msra.mxu0 0
    %122 = vmatpush.bf16.msra.mxu0 0
    %123 = vmatpush.bf16.msra.mxu0 0
    %124 = vmatpush.bf16.msra.mxu0 0
    %125 = vmatpush.bf16.msra.mxu0 0
    %126 = vmatpush.bf16.msra.mxu0 0
    %127 = vmatpush.bf16.msra.mxu0 %v114
    %128 = vmatpush.bf16.msra.mxu0 %v113
    %129 = vmatmul.bf16.gmra.mxu0 %v119
    %v130 = vpop.f32.mrf.mxu0
    %v131 = vadd.f32 %v103, %v130
    %v132 = vpop.f32.mrf.mxu0
    %133 = vdwg.mxu0
    %v134 = vmul.f32 %v131, %v131
    %v135 = vsel %vm117, %v134, 0.0
    %136 = vadd.xlane.f32.xlu0 %v135
    %v137 = vpop.xlane.xlu0 %136
    %v138 = vmax.f32 %v137, 1e-24
    %v139 = vrsqrt.pop %v138
    %v140 = vmul.f32 %v139, %v138
    %v141 = vmul.f32 %v140, %v139
    %v142 = vmul.f32 0.5, %v141
    %v143 = vsub.f32 1.5, %v142
    %v144 = vmul.f32 %v139, %v143
    %vm145 = vweird.f32 %v138
    %vm146 = vweird.f32 %v139
    %vm147 = vmor %vm145, %vm146
    %v148 = vsel %vm147, %v139, %v144
    %v149 = vmul.f32 %v131, %v148
    %150 = vst.msk [vmem:[#allocation12] sm:$0xff] %vm117, %v149
    %v151 = vld [vmem:[#allocation2] sm:$0x1]
    %v152 = vsel %vm117, %v149, 0.0
    %v153 = vrot.slane %v152, 4
    %v154 = vadd.f32 %v152, %v153
    %v155 = vrot.slane %v154, 2
    %v156 = vadd.f32 %v154, %v155
    %v157 = vrot.slane %v156, 1
    %v158 = vadd.f32 %v156, %v157
    %v159 = vadd.f32 %v151, %v158
    %vm160 = vcmask 253952
    %161 = vst.msk [vmem:[#allocation2] sm:$0x1] %vm160, %v159
    // Predicated region
    $region38: #{tpu_custom_call.1} parent=1 // pred_check
      %p162 = pneg %p70
    $region39: #{tpu_custom_call.1} parent=1 // pred_check_branch
      %164 = sbr.rel (%p162) target = $region41
    $region40: #{tpu_custom_call.1} parent=1 // pred_region
      %v165 = vld [vmem:[#allocation2] sm:$0x1]
      %v166 = vmul.f32 %v165, 0.125
      %v167 = vld [vmem:[#allocation3] sm:$0xf]
      %v169 = vsel %vm117, %v166, 0
      %v172 = vsel %vm117, %v167, 0
      %174 = vmatpush.xpose.msra.mxu0 0.0
      %175 = vmatpush.xpose.msra.mxu0 0.0
      %176 = vmatpush.xpose.msra.mxu0 0.0
      %177 = vmatpush.xpose.msra.mxu0 0.0
      %178 = vmatpush.xpose.msra.mxu0 0.0
      %179 = vmatpush.xpose.msra.mxu0 0.0
      %180 = vmatpush.xpose.msra.mxu0 0.0
      %181 = vmatpush.xpose.msra.mxu0 0.0
      %182 = vmatpush.xpose.msra.mxu0 0.0
      %183 = vmatpush.xpose.msra.mxu0 0.0
      %184 = vmatpush.xpose.msra.mxu0 0.0
      %185 = vmatpush.xpose.msra.mxu0 0.0
      %186 = vmatpush.xpose.msra.mxu0 0.0
      %187 = vmatpush.xpose.msra.mxu0 0.0
      %188 = vmatpush.xpose.msra.mxu0 0.0
      %189 = vmatpush.xpose.msra.mxu0 %v172
      %190 = vmatmul.f32.gmra.mxu0 %v169
      %v191 = vpop.f32.mrf.mxu0
      %v192 = vadd.f32 0.0, %v191
      %193 = vdwg.mxu0
      %s194 = sld [smem:[#allocation4]]
      %v195 = vstv %s194
      %v196 = vmul.f32 %v195, 1.442695
      %v197 = vpow.pop %v196
      %s198 = vtos %v197
      %v199 = vstv %s198
      %v200 = vmul.f32 %v199, %v192
      %vm201 = vcmask 24576
      %202 = vst.msk [vmem:[#allocation11] sm:$0x1] %vm201, %v200
    $region41: #{tpu_custom_call.1} parent=1 // pred_fallthru
      _
    // Predicated region
    $region42: #{tpu_custom_call.1} parent=1 // pred_check
      _
    $region43: #{tpu_custom_call.1} parent=1 // pred_check_branch
      %204 = sbr.rel (0) target = $region45
    $region44: #{tpu_custom_call.1} parent=1 // pred_region
      %206 = vsyncadd [#allocation7], 0
      %s208 = sshll.u32 [#allocation11], 4
      %s209 = int_to_ptr.vmem [resolvable:$true] %s208
      %s210 = sshll.u32 %s5, 4
      %s211 = int_to_ptr.hbm [resolvable:$true] %s210
      %213 = dma.vmem_to_hbm [thread:$0]  %s209, 16, %s211, [#allocation7]
    $region45: #{tpu_custom_call.1} parent=1 // pred_fallthru
      _
    // Predicated region
    $region46: #{tpu_custom_call.1} parent=1 // pred_check
      _
    $region47: #{tpu_custom_call.1} parent=1 // pred_check_branch
      %215 = sbr.rel (0) target = $region49
    $region48: #{tpu_custom_call.1} parent=1 // pred_region
      %217 = vsyncadd [#allocation13], 0
      %s219 = sshll.u32 [#allocation12], 4
      %s220 = int_to_ptr.vmem [resolvable:$true] %s219
      %s221 = sshll.u32 %s6, 4
      %s222 = int_to_ptr.hbm [resolvable:$true] %s221
      %224 = dma.vmem_to_hbm [thread:$0]  %s220, 128, %s222, [#allocation13]
    $region49: #{tpu_custom_call.1} parent=1 // pred_fallthru
      _
    // Predicated region
    $region50: #{tpu_custom_call.1} parent=1 // pred_check
      _
    $region51: #{tpu_custom_call.1} parent=1 // pred_check_branch
      %226 = sbr.rel (0) target = $region53
    $region52: #{tpu_custom_call.1} parent=1 // pred_region
      %228 = vsyncadd [#allocation13], 0
      %s230 = sshll.u32 [#allocation14], 4
      %s231 = int_to_ptr.vmem [resolvable:$true] %s230
      %s232 = sshll.u32 %s7, 4
      %s233 = int_to_ptr.hbm [resolvable:$true] %s232
      %235 = dma.vmem_to_hbm [thread:$0]  %s231, 64, %s233, [#allocation13]
    $region53: #{tpu_custom_call.1} parent=1 // pred_fallthru
      _
    // Predicated region
    $region54: #{tpu_custom_call.1} parent=1 // pred_check
      _
    $region55: #{tpu_custom_call.1} parent=1 // pred_check_branch
      %237 = sbr.rel (0) target = $region57
    $region56: #{tpu_custom_call.1} parent=1 // pred_region
      %239 = dma.done [#allocation7], 16
    $region57: #{tpu_custom_call.1} parent=1 // pred_fallthru
      _
    // Predicated region
    $region58: #{tpu_custom_call.1} parent=1 // pred_check
      _
    $region59: #{tpu_custom_call.1} parent=1 // pred_check_branch
      %241 = sbr.rel (0) target = $region61
    $region60: #{tpu_custom_call.1} parent=1 // pred_region
      %243 = dma.done [#allocation13], 128
    $region61: #{tpu_custom_call.1} parent=1 // pred_fallthru
      _
    // Predicated region
    $region62: #{tpu_custom_call.1} parent=1 // pred_check
      _
    $region63: #{tpu_custom_call.1} parent=1 // pred_check_branch
      %245 = sbr.rel (0) target = $region65
    $region64: #{tpu_custom_call.1} parent=1 // pred_region
      %247 = dma.done [#allocation13], 64
    $region65: #{tpu_custom_call.1} parent=1 // pred_fallthru
      _
    %248 = vsyncpa [#allocation6], 1
    %249 = vsyncpa [#allocation9], 1
    %250 = vsyncpa [#allocation7], 1
    %251 = vsyncpa [#allocation13], 1

</llo_original>
